<compile_context>
chip_gen: v7x
topology: tpu7x:2x2x1
jax: 0.10.0
libtpu: 0.0.40
codegen_flags: <defaults>
</compile_context>

<pallas_src>
import functools
import math

import jax
import jax.numpy as jnp
from jax.experimental import pallas as pl
from jax.experimental.pallas import tpu as pltpu


def _round_up(v, m):
    return ((v + m - 1) // m) * m


def _pick_tile(dim_pad, preferred):
    """Largest multiple-of-128 tile <= preferred that divides dim_pad."""
    t = min(preferred, dim_pad)
    while dim_pad % t:
        t -= 128
    return t


# ---------------------------------------------------------------------------
# Kernel 1: h = relu(x @ W)   (row/col tiled, f32, lane-dense padded channels)
# ---------------------------------------------------------------------------
def _h_relu_kernel(x_ref, w_ref, h_ref):
    h = jnp.dot(x_ref[...], w_ref[...], preferred_element_type=jnp.float32)
    h_ref[...] = jnp.maximum(h, 0.0)


# ---------------------------------------------------------------------------
# Kernel 2: out = (A @ h) * inv_deg   (tiled reduction over the neighbor axis)
#   A tile   : bf16 (exact small-integer edge counts), (tm, tk)
#   h block  : f32, (n_pad, tn) column block, resident across i and k
#   inv_deg  : f32, (tm, 128) lane-dense broadcast, applied only at finalize
# ---------------------------------------------------------------------------
def _sage_agg_kernel(a_ref, h_ref, invdeg_ref, out_ref, acc_ref, *, tk):
    k = pl.program_id(2)

    @pl.when(k == 0)
    def _init():
        acc_ref[...] = jnp.zeros_like(acc_ref)

    k_off = pl.multiple_of(k * tk, tk)
    h_blk = h_ref[pl.ds(k_off, tk), :]
    # bf16 A cast back to f32 is exact (integer counts); accumulate in f32 so the
    # result matches the f32 PyTorch forward (aggregation is A-bandwidth-bound,
    # so the f32 MXU passes are not the binding resource).
    acc_ref[...] += jnp.dot(a_ref[...].astype(jnp.float32), h_blk,
                            preferred_element_type=jnp.float32)

    @pl.when(k == pl.num_programs(2) - 1)
    def _finalize():
        out_ref[...] = acc_ref[...] * invdeg_ref[:, 0:1]


# ---------------------------------------------------------------------------
# Wrapper: SAGEConv.forward with pool='mean', bias=None, normalize=False
# ---------------------------------------------------------------------------
def sage_conv_forward(x, weight, edge_index):
    N, f_in = x.shape
    f_out = weight.shape[1]
    row, col = edge_index[0], edge_index[1]

    # --- padded, lane-dense shapes -----------------------------------------
    n_pad = _round_up(N, 128)
    f_in_pad = _round_up(f_in, 128)
    f_out_pad = _round_up(f_out, 128)

    x_pad = jnp.zeros((n_pad, f_in_pad), jnp.float32).at[:N, :f_in].set(
        x.astype(jnp.float32))
    w_pad = jnp.zeros((f_in_pad, f_out_pad), jnp.float32).at[:f_in, :f_out].set(
        weight.astype(jnp.float32))

    # --- glue (plain JAX): remove_self_loops + add_self_loops -> dense A ----
    keep = (row != col).astype(jnp.float32)
    a = jnp.zeros((n_pad, n_pad), jnp.float32)
    a = a.at[row, col].add(keep)                      # remove_self_loops
    a = a.at[jnp.arange(N), jnp.arange(N)].add(1.0)   # add_self_loops (real nodes)
    deg = a.sum(axis=1, keepdims=True)                # >= 1 for real rows
    inv_deg = 1.0 / jnp.maximum(deg, 1.0)             # exact reciprocal in glue
    inv_deg_b = jnp.broadcast_to(inv_deg, (n_pad, 128))
    # bf16 is exact for integer edge counts < 256 (typical duplicate multiplicity)
    a_bf16 = a.astype(jnp.bfloat16)

    # --- tile plan (multiples of 128; modest sizes keep v7x's 64 MiB happy) --
    tm = _pick_tile(n_pad, 256)
    tk = _pick_tile(n_pad, 512)
    tn = _pick_tile(f_out_pad, 256)
    tmh = _pick_tile(n_pad, 256)

    # --- pass 1: h = relu(x @ W), computed once ------------------------------
    h = pl.pallas_call(
        _h_relu_kernel,
        out_shape=jax.ShapeDtypeStruct((n_pad, f_out_pad), jnp.float32),
        grid_spec=pltpu.PrefetchScalarGridSpec(
            num_scalar_prefetch=0,
            grid=(n_pad // tmh, f_out_pad // tn),
            in_specs=[
                pl.BlockSpec((tmh, f_in_pad), lambda i, j: (i, 0)),
                pl.BlockSpec((f_in_pad, tn), lambda i, j: (0, j)),
            ],
            out_specs=pl.BlockSpec((tmh, tn), lambda i, j: (i, j)),
        ),
        compiler_params=pltpu.CompilerParams(
            dimension_semantics=("parallel", "parallel"),
        ),
        cost_estimate=pl.CostEstimate(
            flops=2 * n_pad * f_in_pad * f_out_pad,
            transcendentals=0,
            bytes_accessed=4 * (n_pad * f_in_pad + f_in_pad * f_out_pad
                                + n_pad * f_out_pad),
        ),
    )(x_pad, w_pad)

    # --- pass 2: out = (A @ h) * inv_deg  (tiled reduction, K axis last) ------
    out_pad = pl.pallas_call(
        functools.partial(_sage_agg_kernel, tk=tk),
        out_shape=jax.ShapeDtypeStruct((n_pad, f_out_pad), jnp.float32),
        grid_spec=pltpu.PrefetchScalarGridSpec(
            num_scalar_prefetch=0,
            grid=(n_pad // tm, f_out_pad // tn, n_pad // tk),
            in_specs=[
                pl.BlockSpec((tm, tk), lambda i, j, k: (i, k)),      # A (bf16)
                pl.BlockSpec((n_pad, tn), lambda i, j, k: (0, j)),   # h resident
                pl.BlockSpec((tm, 128), lambda i, j, k: (i, 0)),     # 1/deg
            ],
            out_specs=pl.BlockSpec((tm, tn), lambda i, j, k: (i, j)),
            scratch_shapes=[pltpu.VMEM((tm, tn), jnp.float32)],
        ),
        compiler_params=pltpu.CompilerParams(
            dimension_semantics=("parallel", "parallel", "arbitrary"),
            vmem_limit_bytes=48 * 1024 * 1024,
        ),
        cost_estimate=pl.CostEstimate(
            flops=2 * n_pad * n_pad * f_out_pad,
            transcendentals=0,
            bytes_accessed=(2 * n_pad * n_pad                  # A (bf16)
                            + 4 * n_pad * f_out_pad * 2        # h read + out write
                            + 4 * n_pad * 128),                # inv_deg
        ),
    )(a_bf16, h, inv_deg_b)

    return out_pad[:N, :f_out]


def _reference(x, weight, edge_index):
    # pure-JAX reference of the PyTorch forward (f32 semantics)
    N = x.shape[0]
    row, col = edge_index[0], edge_index[1]
    keep = row != col
    row = jnp.concatenate([row[keep], jnp.arange(N)])
    col = jnp.concatenate([col[keep], jnp.arange(N)])
    h = jnp.maximum(x @ weight, 0.0)
    num = jnp.zeros((N, weight.shape[1]), jnp.float32).at[row].add(h[col])
    cnt = jnp.zeros((N, 1), jnp.float32).at[row].add(1.0)
    return num / jnp.maximum(cnt, 1.0)


if __name__ == "__main__":
    key = jax.random.PRNGKey(0)
    k_x, k_w, k_r, k_c = jax.random.split(key, 4)

    N = 16                 # number of graph nodes
    in_channels = 8
    out_channels = 32
    num_edges = 40

    # deterministic parameter init, matching uniform(size=in_channels, weight)
    stdv = 1.0 / math.sqrt(in_channels)
    weight = jax.random.uniform(
        k_w, (in_channels, out_channels), jnp.float32, minval=-stdv, maxval=stdv
    )

    x = jax.random.normal(k_x, (N, in_channels), jnp.float32)
    row = jax.random.randint(k_r, (num_edges,), 0, N, jnp.int32)
    col = jax.random.randint(k_c, (num_edges,), 0, N, jnp.int32)
    edge_index = jnp.stack([row, col], axis=0)   # [2, num_edges]

    out = jax.jit(sage_conv_forward)(x, weight, edge_index)
    out = jax.block_until_ready(out)

    ref = _reference(x, weight, edge_index)
    assert out.shape == (N, out_channels)
    assert jnp.allclose(out, ref, atol=1e-4, rtol=1e-4), float(
        jnp.max(jnp.abs(out - ref)))

    print("KERNEL_OK")
</pallas_src>

<mosaic_0001>
module attributes {stable_mosaic.version = 11 : i64} {
  func.func private @main(%arg0: i32) attributes {dimension_semantics = [#tpu.dimension_semantics<core_parallel>], iteration_bounds = array<i64: 2>, tpu.core_type = #tpu.core_type<sc_scalar_subcore>, window_params = []} {
    return
  }
}

module attributes {stable_mosaic.version = 11 : i64} {
  func.func private @main(%arg0: i32) attributes {dimension_semantics = [#tpu.dimension_semantics<core_parallel>], iteration_bounds = array<i64: 2>, tpu.core_type = #tpu.core_type<sc_scalar_subcore>, window_params = []} {
    return
  }
}

module attributes {stable_mosaic.version = 11 : i64} {
  func.func @_h_relu_kernel(%arg0: i32, %arg1: i32, %arg2: memref<128x128xf32, #tpu.memory_space<vmem>>, %arg3: memref<128x128xf32, #tpu.memory_space<vmem>>, %arg4: memref<128x128xf32, #tpu.memory_space<vmem>>) attributes {dimension_semantics = [#tpu.dimension_semantics<parallel>, #tpu.dimension_semantics<parallel>], iteration_bounds = array<i64: 1, 1>, scalar_prefetch = 0 : i64, scratch_operands = 0 : i64, tpu.core_type = #tpu.core_type<tc>, window_params = [{transform_indices = @transform_0, window_bounds = array<i64: 128, 128>}, {transform_indices = @transform_1, window_bounds = array<i64: 128, 128>}, {transform_indices = @transform_2, window_bounds = array<i64: 128, 128>}]} {
    %c0 = arith.constant 0 : index
    %c0_0 = arith.constant 0 : index
    %0 = vector.load %arg2[%c0, %c0_0] : memref<128x128xf32, #tpu.memory_space<vmem>>, vector<128x128xf32>
    %c0_1 = arith.constant 0 : index
    %c0_2 = arith.constant 0 : index
    %1 = vector.load %arg3[%c0_1, %c0_2] : memref<128x128xf32, #tpu.memory_space<vmem>>, vector<128x128xf32>
    %cst = arith.constant dense<0.000000e+00> : vector<128x128xf32>
    %2 = tpu.matmul %0, %1, %cst {dimension_numbers = #tpu.dot_dimension_numbers<[1], [0], [0], [1], [0, 0, 1, 1], [], []>} : vector<128x128xf32>, vector<128x128xf32>, vector<128x128xf32> -> vector<128x128xf32>
    %cst_3 = arith.constant 0.000000e+00 : f32
    %3 = vector.broadcast %cst_3 : f32 to vector<128x128xf32>
    %4 = arith.maximumf %2, %3 : vector<128x128xf32>
    %c0_4 = arith.constant 0 : index
    %c0_5 = arith.constant 0 : index
    %5 = vector.load %arg4[%c0_4, %c0_5] : memref<128x128xf32, #tpu.memory_space<vmem>>, vector<128x128xf32>
    tpu.vector_store %arg4[%c0_4, %c0_5], %4 {strides = array<i32>} : memref<128x128xf32, #tpu.memory_space<vmem>>, vector<128x128xf32>,
    return
  }
  func.func @transform_0(%arg0: i32, %arg1: i32) -> (i32, i32) {
    %c0_i32 = arith.constant 0 : i32
    %c0_i32_0 = arith.constant 0 : i32
    return %arg0, %c0_i32 : i32, i32
  }
  func.func @transform_1(%arg0: i32, %arg1: i32) -> (i32, i32) {
    %c0_i32 = arith.constant 0 : i32
    %c0_i32_0 = arith.constant 0 : i32
    return %c0_i32, %arg1 : i32, i32
  }
  func.func @transform_2(%arg0: i32, %arg1: i32) -> (i32, i32) {
    %c0_i32 = arith.constant 0 : i32
    return %arg0, %arg1 : i32, i32
  }
}

module attributes {stable_mosaic.version = 11 : i64} {
  func.func @_sage_agg_kernel(%arg0: i32, %arg1: i32, %arg2: i32, %arg3: memref<128x128xbf16, #tpu.memory_space<vmem>>, %arg4: memref<128x128xf32, #tpu.memory_space<vmem>>, %arg5: memref<128x128xf32, #tpu.memory_space<vmem>>, %arg6: memref<128x128xf32, #tpu.memory_space<vmem>>, %arg7: memref<128x128xf32, #tpu.memory_space<vmem>>) attributes {dimension_semantics = [#tpu.dimension_semantics<parallel>, #tpu.dimension_semantics<parallel>, #tpu.dimension_semantics<arbitrary>], iteration_bounds = array<i64: 1, 1, 1>, scalar_prefetch = 0 : i64, scratch_operands = 1 : i64, tpu.core_type = #tpu.core_type<tc>, window_params = [{transform_indices = @transform_0, window_bounds = array<i64: 128, 128>}, {transform_indices = @transform_1, window_bounds = array<i64: 128, 128>}, {transform_indices = @transform_2, window_bounds = array<i64: 128, 128>}, {transform_indices = @transform_3, window_bounds = array<i64: 128, 128>}]} {
    %c0_i32 = arith.constant 0 : i32
    %0 = arith.cmpi eq, %arg2, %c0_i32 : i32
    %1 = arith.extui %0 : i1 to i32
    %c0_i32_0 = arith.constant 0 : i32
    %2 = arith.cmpi ne, %1, %c0_i32_0 : i32
    scf.if %2 {
      %cst_9 = arith.constant 0.000000e+00 : f32
      %16 = vector.broadcast %cst_9 : f32 to vector<128x128xf32>
      %c0_10 = arith.constant 0 : index
      %c0_11 = arith.constant 0 : index
      %17 = vector.load %arg7[%c0_10, %c0_11] : memref<128x128xf32, #tpu.memory_space<vmem>>, vector<128x128xf32>
      tpu.vector_store %arg7[%c0_10, %c0_11], %16 {strides = array<i32>} : memref<128x128xf32, #tpu.memory_space<vmem>>, vector<128x128xf32>,
    } else {
    }
    %c128_i32 = arith.constant 128 : i32
    %3 = arith.muli %arg2, %c128_i32 : i32
    %4 = tpu.assume_multiple %3, 128 : i32
    %5 = arith.index_cast %4 : i32 to index
    %c0 = arith.constant 0 : index
    %6 = vector.load %arg4[%5, %c0] : memref<128x128xf32, #tpu.memory_space<vmem>>, vector<128x128xf32>
    %c0_1 = arith.constant 0 : index
    %c0_2 = arith.constant 0 : index
    %7 = vector.load %arg7[%c0_1, %c0_2] : memref<128x128xf32, #tpu.memory_space<vmem>>, vector<128x128xf32>
    %c0_3 = arith.constant 0 : index
    %c0_4 = arith.constant 0 : index
    %8 = vector.load %arg3[%c0_3, %c0_4] : memref<128x128xbf16, #tpu.memory_space<vmem>>, vector<128x128xbf16>
    %9 = arith.extf %8 : vector<128x128xbf16> to vector<128x128xf32>
    %cst = arith.constant dense<0.000000e+00> : vector<128x128xf32>
    %10 = tpu.matmul %9, %6, %cst {dimension_numbers = #tpu.dot_dimension_numbers<[1], [0], [0], [1], [0, 0, 1, 1], [], []>} : vector<128x128xf32>, vector<128x128xf32>, vector<128x128xf32> -> vector<128x128xf32>
    %11 = arith.addf %7, %10 : vector<128x128xf32>
    %c0_5 = arith.constant 0 : index
    %c0_6 = arith.constant 0 : index
    %12 = vector.load %arg7[%c0_5, %c0_6] : memref<128x128xf32, #tpu.memory_space<vmem>>, vector<128x128xf32>
    tpu.vector_store %arg7[%c0_5, %c0_6], %11 {strides = array<i32>} : memref<128x128xf32, #tpu.memory_space<vmem>>, vector<128x128xf32>,
    %c0_i32_7 = arith.constant 0 : i32
    %13 = arith.cmpi eq, %arg2, %c0_i32_7 : i32
    %14 = arith.extui %13 : i1 to i32
    %c0_i32_8 = arith.constant 0 : i32
    %15 = arith.cmpi ne, %14, %c0_i32_8 : i32
    scf.if %15 {
      %c0_9 = arith.constant 0 : index
      %c0_10 = arith.constant 0 : index
      %16 = vector.load %arg7[%c0_9, %c0_10] : memref<128x128xf32, #tpu.memory_space<vmem>>, vector<128x128xf32>
      %c0_11 = arith.constant 0 : index
      %c0_12 = arith.constant 0 : index
      %17 = vector.load %arg5[%c0_11, %c0_12] : memref<128x128xf32, #tpu.memory_space<vmem>>, vector<128x1xf32>
      %18 = vector.broadcast %17 : vector<128x1xf32> to vector<128x128xf32>
      %19 = arith.mulf %16, %18 : vector<128x128xf32>
      %c0_13 = arith.constant 0 : index
      %c0_14 = arith.constant 0 : index
      %20 = vector.load %arg6[%c0_13, %c0_14] : memref<128x128xf32, #tpu.memory_space<vmem>>, vector<128x128xf32>
      tpu.vector_store %arg6[%c0_13, %c0_14], %19 {strides = array<i32>} : memref<128x128xf32, #tpu.memory_space<vmem>>, vector<128x128xf32>,
    } else {
    }
    return
  }
  func.func @transform_0(%arg0: i32, %arg1: i32, %arg2: i32) -> (i32, i32) {
    %c0_i32 = arith.constant 0 : i32
    return %arg0, %arg2 : i32, i32
  }
  func.func @transform_1(%arg0: i32, %arg1: i32, %arg2: i32) -> (i32, i32) {
    %c0_i32 = arith.constant 0 : i32
    %c0_i32_0 = arith.constant 0 : i32
    return %c0_i32, %arg1 : i32, i32
  }
  func.func @transform_2(%arg0: i32, %arg1: i32, %arg2: i32) -> (i32, i32) {
    %c0_i32 = arith.constant 0 : i32
    %c0_i32_0 = arith.constant 0 : i32
    return %arg0, %c0_i32 : i32, i32
  }
  func.func @transform_3(%arg0: i32, %arg1: i32, %arg2: i32) -> (i32, i32) {
    %c0_i32 = arith.constant 0 : i32
    return %arg0, %arg1 : i32, i32
  }
}

</mosaic_0001>

<llo_original>
// kernel: sage_conv_forward.2
$region0: #{sage_conv_forward.2}
  #allocation0 [shape = 'u32[]', space=smem, size = 0x4, offset = 0x4, fixed_abs, tag = 'smem constant byte address 0x4 - core index']
  #allocation1 [shape = 'u32[144,128]{1,0:T(1,128)}', space=vmem, size = 0x12000, scoped, tag = 'internal scratch']
  %s0 = inlined_call_operand.vmem [shape: f32[128,128], index: 0, kind: input, shape index: {}]
  %s1 = inlined_call_operand.vmem [shape: f32[128,128], index: 1, kind: input, shape index: {}]
  %s2 = inlined_call_operand.vmem [shape: f32[128,128], index: 2, kind: output, shape index: {}]
  %s3 = sld [smem:[#allocation0]]
  $region18: #{sage_conv_forward.2} parent=0
    _
  %s5 = ssub.s32 1, %s3
  %s6 = scalar_select 0, %s5, %s3
  // Predicated region
  $region2: #{sage_conv_forward.2} parent=0 // pred_check
    _
  $region3: #{sage_conv_forward.2} parent=0 // pred_check_branch
    %8 = sbr.rel (0) target = $region5
  $region4: #{sage_conv_forward.2} parent=0 // pred_region
    _
  $region5: #{sage_conv_forward.2} parent=0 // pred_fallthru
    _
  // Predicated region
  $region6: #{sage_conv_forward.2} parent=0 // pred_check
    _
  $region7: #{sage_conv_forward.2} parent=0 // pred_check_branch
    %10 = sbr.rel (0) target = $region9
  $region8: #{sage_conv_forward.2} parent=0 // pred_region
    _
  $region9: #{sage_conv_forward.2} parent=0 // pred_fallthru
    _
  %v11 = vld [vmem:[%s0] sm:$0xff]
  %v12 = vld [vmem:[%s0 + $0x8] sm:$0xff]
  %v13 = vld [vmem:[%s0 + $0x10] sm:$0xff]
  %v14 = vld [vmem:[%s0 + $0x18] sm:$0xff]
  %v15 = vld [vmem:[%s0 + $0x20] sm:$0xff]
  %v16 = vld [vmem:[%s0 + $0x28] sm:$0xff]
  %v17 = vld [vmem:[%s0 + $0x30] sm:$0xff]
  %v18 = vld [vmem:[%s0 + $0x38] sm:$0xff]
  %v19 = vld [vmem:[%s0 + $0x40] sm:$0xff]
  %v20 = vld [vmem:[%s0 + $0x48] sm:$0xff]
  %v21 = vld [vmem:[%s0 + $0x50] sm:$0xff]
  %v22 = vld [vmem:[%s0 + $0x58] sm:$0xff]
  %v23 = vld [vmem:[%s0 + $0x60] sm:$0xff]
  %v24 = vld [vmem:[%s0 + $0x68] sm:$0xff]
  %v25 = vld [vmem:[%s0 + $0x70] sm:$0xff]
  %v26 = vld [vmem:[%s0 + $0x78] sm:$0xff]
  %v27 = vld [vmem:[%s1] sm:$0xff]
  %v28 = vld [vmem:[%s1 + $0x8] sm:$0xff]
  %v29 = vld [vmem:[%s1 + $0x10] sm:$0xff]
  %v30 = vld [vmem:[%s1 + $0x18] sm:$0xff]
  %v31 = vld [vmem:[%s1 + $0x20] sm:$0xff]
  %v32 = vld [vmem:[%s1 + $0x28] sm:$0xff]
  %v33 = vld [vmem:[%s1 + $0x30] sm:$0xff]
  %v34 = vld [vmem:[%s1 + $0x38] sm:$0xff]
  %v35 = vld [vmem:[%s1 + $0x40] sm:$0xff]
  %v36 = vld [vmem:[%s1 + $0x48] sm:$0xff]
  %v37 = vld [vmem:[%s1 + $0x50] sm:$0xff]
  %v38 = vld [vmem:[%s1 + $0x58] sm:$0xff]
  %v39 = vld [vmem:[%s1 + $0x60] sm:$0xff]
  %v40 = vld [vmem:[%s1 + $0x68] sm:$0xff]
  %v41 = vld [vmem:[%s1 + $0x70] sm:$0xff]
  %v42 = vld [vmem:[%s1 + $0x78] sm:$0xff]
  %43 = vmatprep.subr.mxu0 0.0
  %44 = vmatpush1.msra.mxu0 %v27
  %45 = vmatprep.subr.mxu0 0.0
  %46 = vmatpush1.msra.mxu0 %v28
  %47 = vmatprep.subr.mxu0 0.0
  %48 = vmatpush1.msra.mxu0 %v29
  %49 = vmatprep.subr.mxu0 0.0
  %50 = vmatpush1.msra.mxu0 %v30
  %51 = vmatprep.subr.mxu0 0.0
  %52 = vmatpush1.msra.mxu0 %v31
  %53 = vmatprep.subr.mxu0 0.0
  %54 = vmatpush1.msra.mxu0 %v32
  %55 = vmatprep.subr.mxu0 0.0
  %56 = vmatpush1.msra.mxu0 %v33
  %57 = vmatprep.subr.mxu0 0.0
  %58 = vmatpush1.msra.mxu0 %v34
  %59 = vmatprep.subr.mxu0 0.0
  %60 = vmatpush1.msra.mxu0 %v35
  %61 = vmatprep.subr.mxu0 0.0
  %62 = vmatpush1.msra.mxu0 %v36
  %63 = vmatprep.subr.mxu0 0.0
  %64 = vmatpush1.msra.mxu0 %v37
  %65 = vmatprep.subr.mxu0 0.0
  %66 = vmatpush1.msra.mxu0 %v38
  %67 = vmatprep.subr.mxu0 0.0
  %68 = vmatpush1.msra.mxu0 %v39
  %69 = vmatprep.subr.mxu0 0.0
  %70 = vmatpush1.msra.mxu0 %v40
  %71 = vmatprep.subr.mxu0 0.0
  %72 = vmatpush1.msra.mxu0 %v41
  %73 = vmatprep.subr.mxu0 0.0
  %74 = vmatpush1.msra.mxu0 %v42
  %75 = vmatprep.subr.mxu0 0.0
  %76 = vmatpush1.msra.mxu0 0.0
  %77 = vmatprep.subr.mxu0 0.0
  %78 = vmatpush1.msra.mxu0 0.0
  %79 = vmatprep.subr.mxu0 0.0
  %80 = vmatpush1.msra.mxu0 0.0
  %81 = vmatprep.subr.mxu0 0.0
  %82 = vmatpush1.msra.mxu0 0.0
  %83 = vmatprep.subr.mxu0 0.0
  %84 = vmatpush1.msra.mxu0 0.0
  %85 = vmatprep.subr.mxu0 0.0
  %86 = vmatpush1.msra.mxu0 0.0
  %87 = vmatprep.subr.mxu0 0.0
  %88 = vmatpush1.msra.mxu0 0.0
  %89 = vmatprep.subr.mxu0 0.0
  %90 = vmatpush1.msra.mxu0 0.0
  %91 = vmatprep.subr.mxu0 0.0
  %92 = vmatpush1.msra.mxu0 0.0
  %93 = vmatprep.subr.mxu0 0.0
  %94 = vmatpush1.msra.mxu0 0.0
  %95 = vmatprep.subr.mxu0 0.0
  %96 = vmatpush1.msra.mxu0 0.0
  %97 = vmatprep.subr.mxu0 0.0
  %98 = vmatpush1.msra.mxu0 0.0
  %99 = vmatprep.subr.mxu0 0.0
  %100 = vmatpush1.msra.mxu0 0.0
  %101 = vmatprep.subr.mxu0 0.0
  %102 = vmatpush1.msra.mxu0 0.0
  %103 = vmatprep.subr.mxu0 0.0
  %104 = vmatpush1.msra.mxu0 0.0
  %105 = vmatprep.subr.mxu0 0.0
  %106 = vmatpush1.msra.mxu0 0.0
  %107 = vmatprep.mubr.f32.mxu0 0.0
  %108 = vmatmul.mubr.f32.gmra.mrb[0].mxu0 %v11
  %v109 = vpop.f32.mrb[0].mxu0
  %v110 = vadd.f32 0.0, %v109
  %v111 = vpop.f32.mrb[0].mxu0
  %112 = vmatprep.mubr.f32.mxu0 0.0
  %113 = vmatmul.mubr.f32.gmra.mrb[0].mxu0 %v12
  %v114 = vpop.f32.mrb[0].mxu0
  %v115 = vadd.f32 0.0, %v114
  %v116 = vpop.f32.mrb[0].mxu0
  %117 = vmatprep.mubr.f32.mxu0 0.0
  %118 = vmatmul.mubr.f32.gmra.mrb[0].mxu0 %v13
  %v119 = vpop.f32.mrb[0].mxu0
  %v120 = vadd.f32 0.0, %v119
  %v121 = vpop.f32.mrb[0].mxu0
  %122 = vmatprep.mubr.f32.mxu0 0.0
  %123 = vmatmul.mubr.f32.gmra.mrb[0].mxu0 %v14
  %v124 = vpop.f32.mrb[0].mxu0
  %v125 = vadd.f32 0.0, %v124
  %v126 = vpop.f32.mrb[0].mxu0
  %127 = vmatprep.mubr.f32.mxu0 0.0
  %128 = vmatmul.mubr.f32.gmra.mrb[0].mxu0 %v15
  %v129 = vpop.f32.mrb[0].mxu0
  %v130 = vadd.f32 0.0, %v129
  %v131 = vpop.f32.mrb[0].mxu0
  %132 = vmatprep.mubr.f32.mxu0 0.0
  %133 = vmatmul.mubr.f32.gmra.mrb[0].mxu0 %v16
  %v134 = vpop.f32.mrb[0].mxu0
  %v135 = vadd.f32 0.0, %v134
  %v136 = vpop.f32.mrb[0].mxu0
  %137 = vmatprep.mubr.f32.mxu0 0.0
  %138 = vmatmul.mubr.f32.gmra.mrb[0].mxu0 %v17
  %v139 = vpop.f32.mrb[0].mxu0
  %v140 = vadd.f32 0.0, %v139
  %v141 = vpop.f32.mrb[0].mxu0
  %142 = vmatprep.mubr.f32.mxu0 0.0
  %143 = vmatmul.mubr.f32.gmra.mrb[0].mxu0 %v18
  %v144 = vpop.f32.mrb[0].mxu0
  %v145 = vadd.f32 0.0, %v144
  %v146 = vpop.f32.mrb[0].mxu0
  %147 = vmatprep.mubr.f32.mxu0 0.0
  %148 = vmatmul.mubr.f32.gmra.mrb[0].mxu0 %v19
  %v149 = vpop.f32.mrb[0].mxu0
  %v150 = vadd.f32 0.0, %v149
  %v151 = vpop.f32.mrb[0].mxu0
  %152 = vmatprep.mubr.f32.mxu0 0.0
  %153 = vmatmul.mubr.f32.gmra.mrb[0].mxu0 %v20
  %v154 = vpop.f32.mrb[0].mxu0
  %v155 = vadd.f32 0.0, %v154
  %v156 = vpop.f32.mrb[0].mxu0
  %157 = vmatprep.mubr.f32.mxu0 0.0
  %158 = vmatmul.mubr.f32.gmra.mrb[0].mxu0 %v21
  %v159 = vpop.f32.mrb[0].mxu0
  %v160 = vadd.f32 0.0, %v159
  %v161 = vpop.f32.mrb[0].mxu0
  %162 = vmatprep.mubr.f32.mxu0 0.0
  %163 = vmatmul.mubr.f32.gmra.mrb[0].mxu0 %v22
  %v164 = vpop.f32.mrb[0].mxu0
  %v165 = vadd.f32 0.0, %v164
  %v166 = vpop.f32.mrb[0].mxu0
  %167 = vmatprep.mubr.f32.mxu0 0.0
  %168 = vmatmul.mubr.f32.gmra.mrb[0].mxu0 %v23
  %v169 = vpop.f32.mrb[0].mxu0
  %v170 = vadd.f32 0.0, %v169
  %v171 = vpop.f32.mrb[0].mxu0
  %172 = vmatprep.mubr.f32.mxu0 0.0
  %173 = vmatmul.mubr.f32.gmra.mrb[0].mxu0 %v24
  %v174 = vpop.f32.mrb[0].mxu0
  %v175 = vadd.f32 0.0, %v174
  %v176 = vpop.f32.mrb[0].mxu0
  %177 = vmatprep.mubr.f32.mxu0 0.0
  %178 = vmatmul.mubr.f32.gmra.mrb[0].mxu0 %v25
  %v179 = vpop.f32.mrb[0].mxu0
  %v180 = vadd.f32 0.0, %v179
  %v181 = vpop.f32.mrb[0].mxu0
  %182 = vmatprep.mubr.f32.mxu0 0.0
  %183 = vmatmul.mubr.f32.gmra.mrb[0].mxu0 %v26
  %v184 = vpop.f32.mrb[0].mxu0
  %v185 = vadd.f32 0.0, %v184
  %v186 = vpop.f32.mrb[0].mxu0
  %187 = vdwg.mxu0
  %v188 = vmax.f32 %v110, 0.0
  %v189 = vmax.f32 %v115, 0.0
  %v190 = vmax.f32 %v120, 0.0
  %v191 = vmax.f32 %v125, 0.0
  %v192 = vmax.f32 %v130, 0.0
  %v193 = vmax.f32 %v135, 0.0
  %v194 = vmax.f32 %v140, 0.0
  %v195 = vmax.f32 %v145, 0.0
  %v196 = vmax.f32 %v150, 0.0
  %v197 = vmax.f32 %v155, 0.0
  %v198 = vmax.f32 %v160, 0.0
  %v199 = vmax.f32 %v165, 0.0
  %v200 = vmax.f32 %v170, 0.0
  %v201 = vmax.f32 %v175, 0.0
  %v202 = vmax.f32 %v180, 0.0
  %v203 = vmax.f32 %v185, 0.0
  %204 = vst [vmem:[%s2] sm:$0xff] %v188
  %205 = vst [vmem:[%s2 + $0x8] sm:$0xff] %v189
  %206 = vst [vmem:[%s2 + $0x10] sm:$0xff] %v190
  %207 = vst [vmem:[%s2 + $0x18] sm:$0xff] %v191
  %208 = vst [vmem:[%s2 + $0x20] sm:$0xff] %v192
  %209 = vst [vmem:[%s2 + $0x28] sm:$0xff] %v193
  %210 = vst [vmem:[%s2 + $0x30] sm:$0xff] %v194
  %211 = vst [vmem:[%s2 + $0x38] sm:$0xff] %v195
  %212 = vst [vmem:[%s2 + $0x40] sm:$0xff] %v196
  %213 = vst [vmem:[%s2 + $0x48] sm:$0xff] %v197
  %214 = vst [vmem:[%s2 + $0x50] sm:$0xff] %v198
  %215 = vst [vmem:[%s2 + $0x58] sm:$0xff] %v199
  %216 = vst [vmem:[%s2 + $0x60] sm:$0xff] %v200
  %217 = vst [vmem:[%s2 + $0x68] sm:$0xff] %v201
  %218 = vst [vmem:[%s2 + $0x70] sm:$0xff] %v202
  %219 = vst [vmem:[%s2 + $0x78] sm:$0xff] %v203
  // Predicated region
  $region10: #{sage_conv_forward.2} parent=0 // pred_check
    _
  $region11: #{sage_conv_forward.2} parent=0 // pred_check_branch
    %221 = sbr.rel (0) target = $region13
  $region12: #{sage_conv_forward.2} parent=0 // pred_region
    _
  $region13: #{sage_conv_forward.2} parent=0 // pred_fallthru
    _
  // Predicated region
  $region14: #{sage_conv_forward.2} parent=0 // pred_check
    _
  $region15: #{sage_conv_forward.2} parent=0 // pred_check_branch
    %223 = sbr.rel (0) target = $region17
  $region16: #{sage_conv_forward.2} parent=0 // pred_region
    _
  $region17: #{sage_conv_forward.2} parent=0 // pred_fallthru
    _

// kernel: sage_conv_forward.3
$region0: #{sage_conv_forward.3}
  #allocation0 [shape = 'u32[]', space=smem, size = 0x4, offset = 0x4, fixed_abs, tag = 'smem constant byte address 0x4 - core index']
  #allocation1 [shape = 'u32[144,128]{1,0:T(1,128)}', space=vmem, size = 0x12000, scoped, tag = 'internal scratch']
  #allocation2 [shape = 'f32[128,128]{1,0:T(8,128)}', space=vmem, size = 0x10000, scoped, tag = 'scratch operand']
  %s0 = inlined_call_operand.vmem [shape: bf16[128,128], index: 0, kind: input, shape index: {}]
  %s1 = inlined_call_operand.vmem [shape: f32[128,128], index: 1, kind: input, shape index: {}]
  %s2 = inlined_call_operand.vmem [shape: f32[128,128], index: 2, kind: input, shape index: {}]
  %s3 = inlined_call_operand.vmem [shape: f32[128,128], index: 3, kind: output, shape index: {}]
  %s4 = sld [smem:[#allocation0]]
  $region30: #{sage_conv_forward.3} parent=0
    _
  %s6 = ssub.s32 1, %s4
  %s7 = scalar_select 0, %s6, %s4
  // Predicated region
  $region2: #{sage_conv_forward.3} parent=0 // pred_check
    _
  $region3: #{sage_conv_forward.3} parent=0 // pred_check_branch
    %9 = sbr.rel (0) target = $region5
  $region4: #{sage_conv_forward.3} parent=0 // pred_region
    _
  $region5: #{sage_conv_forward.3} parent=0 // pred_fallthru
    _
  // Predicated region
  $region6: #{sage_conv_forward.3} parent=0 // pred_check
    _
  $region7: #{sage_conv_forward.3} parent=0 // pred_check_branch
    %11 = sbr.rel (0) target = $region9
  $region8: #{sage_conv_forward.3} parent=0 // pred_region
    _
  $region9: #{sage_conv_forward.3} parent=0 // pred_fallthru
    _
  // Predicated region
  $region10: #{sage_conv_forward.3} parent=0 // pred_check
    _
  $region11: #{sage_conv_forward.3} parent=0 // pred_check_branch
    %13 = sbr.rel (0) target = $region13
  $region12: #{sage_conv_forward.3} parent=0 // pred_region
    _
  $region13: #{sage_conv_forward.3} parent=0 // pred_fallthru
    _
  %p14 = scmp.eq.s32.totalorder 0, 0
  // Predicated region
  $region14: #{sage_conv_forward.3} parent=0 // pred_check
    %p15 = pneg %p14
  $region15: #{sage_conv_forward.3} parent=0 // pred_check_branch
    %17 = sbr.rel (%p15) target = $region17
  $region16: #{sage_conv_forward.3} parent=0 // pred_region
    %18 = vst [vmem:[#allocation2] sm:$0xff] 0.0
    %19 = vst [vmem:[#allocation2 + $0x8] sm:$0xff] 0.0
    %20 = vst [vmem:[#allocation2 + $0x10] sm:$0xff] 0.0
    %21 = vst [vmem:[#allocation2 + $0x18] sm:$0xff] 0.0
    %22 = vst [vmem:[#allocation2 + $0x20] sm:$0xff] 0.0
    %23 = vst [vmem:[#allocation2 + $0x28] sm:$0xff] 0.0
    %24 = vst [vmem:[#allocation2 + $0x30] sm:$0xff] 0.0
    %25 = vst [vmem:[#allocation2 + $0x38] sm:$0xff] 0.0
    %26 = vst [vmem:[#allocation2 + $0x40] sm:$0xff] 0.0
    %27 = vst [vmem:[#allocation2 + $0x48] sm:$0xff] 0.0
    %28 = vst [vmem:[#allocation2 + $0x50] sm:$0xff] 0.0
    %29 = vst [vmem:[#allocation2 + $0x58] sm:$0xff] 0.0
    %30 = vst [vmem:[#allocation2 + $0x60] sm:$0xff] 0.0
    %31 = vst [vmem:[#allocation2 + $0x68] sm:$0xff] 0.0
    %32 = vst [vmem:[#allocation2 + $0x70] sm:$0xff] 0.0
    %33 = vst [vmem:[#allocation2 + $0x78] sm:$0xff] 0.0
  $region17: #{sage_conv_forward.3} parent=0 // pred_fallthru
    _
  %s34 = smul.u32 0, 128
  %s35 = scalar_lea.vmem %s1, %s34
  %v36 = vld [vmem:[%s35] sm:$0xff]
  %v37 = vld [vmem:[%s35 + $0x8] sm:$0xff]
  %v38 = vld [vmem:[%s35 + $0x10] sm:$0xff]
  %v39 = vld [vmem:[%s35 + $0x18] sm:$0xff]
  %v40 = vld [vmem:[%s35 + $0x20] sm:$0xff]
  %v41 = vld [vmem:[%s35 + $0x28] sm:$0xff]
  %v42 = vld [vmem:[%s35 + $0x30] sm:$0xff]
  %v43 = vld [vmem:[%s35 + $0x38] sm:$0xff]
  %v44 = vld [vmem:[%s35 + $0x40] sm:$0xff]
  %v45 = vld [vmem:[%s35 + $0x48] sm:$0xff]
  %v46 = vld [vmem:[%s35 + $0x50] sm:$0xff]
  %v47 = vld [vmem:[%s35 + $0x58] sm:$0xff]
  %v48 = vld [vmem:[%s35 + $0x60] sm:$0xff]
  %v49 = vld [vmem:[%s35 + $0x68] sm:$0xff]
  %v50 = vld [vmem:[%s35 + $0x70] sm:$0xff]
  %v51 = vld [vmem:[%s35 + $0x78] sm:$0xff]
  %v52 = vld [vmem:[#allocation2] sm:$0xff]
  %v53 = vld [vmem:[#allocation2 + $0x8] sm:$0xff]
  %v54 = vld [vmem:[#allocation2 + $0x10] sm:$0xff]
  %v55 = vld [vmem:[#allocation2 + $0x18] sm:$0xff]
  %v56 = vld [vmem:[#allocation2 + $0x20] sm:$0xff]
  %v57 = vld [vmem:[#allocation2 + $0x28] sm:$0xff]
  %v58 = vld [vmem:[#allocation2 + $0x30] sm:$0xff]
  %v59 = vld [vmem:[#allocation2 + $0x38] sm:$0xff]
  %v60 = vld [vmem:[#allocation2 + $0x40] sm:$0xff]
  %v61 = vld [vmem:[#allocation2 + $0x48] sm:$0xff]
  %v62 = vld [vmem:[#allocation2 + $0x50] sm:$0xff]
  %v63 = vld [vmem:[#allocation2 + $0x58] sm:$0xff]
  %v64 = vld [vmem:[#allocation2 + $0x60] sm:$0xff]
  %v65 = vld [vmem:[#allocation2 + $0x68] sm:$0xff]
  %v66 = vld [vmem:[#allocation2 + $0x70] sm:$0xff]
  %v67 = vld [vmem:[#allocation2 + $0x78] sm:$0xff]
  %v68 = vld [vmem:[%s0] sm:$0xf]
  %v69 = vld [vmem:[%s0 + $0x4] sm:$0xf]
  %v70 = vld [vmem:[%s0 + $0x8] sm:$0xf]
  %v71 = vld [vmem:[%s0 + $0xc] sm:$0xf]
  %v72 = vld [vmem:[%s0 + $0x10] sm:$0xf]
  %v73 = vld [vmem:[%s0 + $0x14] sm:$0xf]
  %v74 = vld [vmem:[%s0 + $0x18] sm:$0xf]
  %v75 = vld [vmem:[%s0 + $0x1c] sm:$0xf]
  %v76 = vld [vmem:[%s0 + $0x20] sm:$0xf]
  %v77 = vld [vmem:[%s0 + $0x24] sm:$0xf]
  %v78 = vld [vmem:[%s0 + $0x28] sm:$0xf]
  %v79 = vld [vmem:[%s0 + $0x2c] sm:$0xf]
  %v80 = vld [vmem:[%s0 + $0x30] sm:$0xf]
  %v81 = vld [vmem:[%s0 + $0x34] sm:$0xf]
  %v82 = vld [vmem:[%s0 + $0x38] sm:$0xf]
  %v83 = vld [vmem:[%s0 + $0x3c] sm:$0xf]
  %v84 = vunpack.c.l.bf16 %v68
  %v85 = vunpack.c.l.bf16 %v69
  %v86 = vunpack.c.l.bf16 %v70
  %v87 = vunpack.c.l.bf16 %v71
  %v88 = vunpack.c.l.bf16 %v72
  %v89 = vunpack.c.l.bf16 %v73
  %v90 = vunpack.c.l.bf16 %v74
  %v91 = vunpack.c.l.bf16 %v75
  %v92 = vunpack.c.l.bf16 %v76
  %v93 = vunpack.c.l.bf16 %v77
  %v94 = vunpack.c.l.bf16 %v78
  %v95 = vunpack.c.l.bf16 %v79
  %v96 = vunpack.c.l.bf16 %v80
  %v97 = vunpack.c.l.bf16 %v81
  %v98 = vunpack.c.l.bf16 %v82
  %v99 = vunpack.c.l.bf16 %v83
  %100 = vmatprep.subr.mxu0 0.0
  %101 = vmatpush1.msra.mxu0 %v36
  %102 = vmatprep.subr.mxu0 0.0
  %103 = vmatpush1.msra.mxu0 %v37
  %104 = vmatprep.subr.mxu0 0.0
  %105 = vmatpush1.msra.mxu0 %v38
  %106 = vmatprep.subr.mxu0 0.0
  %107 = vmatpush1.msra.mxu0 %v39
  %108 = vmatprep.subr.mxu0 0.0
  %109 = vmatpush1.msra.mxu0 %v40
  %110 = vmatprep.subr.mxu0 0.0
  %111 = vmatpush1.msra.mxu0 %v41
  %112 = vmatprep.subr.mxu0 0.0
  %113 = vmatpush1.msra.mxu0 %v42
  %114 = vmatprep.subr.mxu0 0.0
  %115 = vmatpush1.msra.mxu0 %v43
  %116 = vmatprep.subr.mxu0 0.0
  %117 = vmatpush1.msra.mxu0 %v44
  %118 = vmatprep.subr.mxu0 0.0
  %119 = vmatpush1.msra.mxu0 %v45
  %120 = vmatprep.subr.mxu0 0.0
  %121 = vmatpush1.msra.mxu0 %v46
  %122 = vmatprep.subr.mxu0 0.0
  %123 = vmatpush1.msra.mxu0 %v47
  %124 = vmatprep.subr.mxu0 0.0
  %125 = vmatpush1.msra.mxu0 %v48
  %126 = vmatprep.subr.mxu0 0.0
  %127 = vmatpush1.msra.mxu0 %v49
  %128 = vmatprep.subr.mxu0 0.0
  %129 = vmatpush1.msra.mxu0 %v50
  %130 = vmatprep.subr.mxu0 0.0
  %131 = vmatpush1.msra.mxu0 %v51
  %132 = vmatprep.subr.mxu0 0.0
  %133 = vmatpush1.msra.mxu0 0.0
  %134 = vmatprep.subr.mxu0 0.0
  %135 = vmatpush1.msra.mxu0 0.0
  %136 = vmatprep.subr.mxu0 0.0
  %137 = vmatpush1.msra.mxu0 0.0
  %138 = vmatprep.subr.mxu0 0.0
  %139 = vmatpush1.msra.mxu0 0.0
  %140 = vmatprep.subr.mxu0 0.0
  %141 = vmatpush1.msra.mxu0 0.0
  %142 = vmatprep.subr.mxu0 0.0
  %143 = vmatpush1.msra.mxu0 0.0
  %144 = vmatprep.subr.mxu0 0.0
  %145 = vmatpush1.msra.mxu0 0.0
  %146 = vmatprep.subr.mxu0 0.0
  %147 = vmatpush1.msra.mxu0 0.0
  %148 = vmatprep.subr.mxu0 0.0
  %149 = vmatpush1.msra.mxu0 0.0
  %150 = vmatprep.subr.mxu0 0.0
  %151 = vmatpush1.msra.mxu0 0.0
  %152 = vmatprep.subr.mxu0 0.0
  %153 = vmatpush1.msra.mxu0 0.0
  %154 = vmatprep.subr.mxu0 0.0
  %155 = vmatpush1.msra.mxu0 0.0
  %156 = vmatprep.subr.mxu0 0.0
  %157 = vmatpush1.msra.mxu0 0.0
  %158 = vmatprep.subr.mxu0 0.0
  %159 = vmatpush1.msra.mxu0 0.0
  %160 = vmatprep.subr.mxu0 0.0
  %161 = vmatpush1.msra.mxu0 0.0
  %162 = vmatprep.subr.mxu0 0.0
  %163 = vmatpush1.msra.mxu0 0.0
  %164 = vmatprep.mubr.f32.mxu0 0.0
  %165 = vmatmul.mubr.f32.gmra.mrb[0].mxu0 %v84
  %v166 = vpop.f32.mrb[0].mxu0
  %v167 = vadd.f32 0.0, %v166
  %v168 = vpop.f32.mrb[0].mxu0
  %169 = vmatprep.mubr.f32.mxu0 0.0
  %170 = vmatmul.mubr.f32.gmra.mrb[0].mxu0 %v85
  %v171 = vpop.f32.mrb[0].mxu0
  %v172 = vadd.f32 0.0, %v171
  %v173 = vpop.f32.mrb[0].mxu0
  %174 = vmatprep.mubr.f32.mxu0 0.0
  %175 = vmatmul.mubr.f32.gmra.mrb[0].mxu0 %v86
  %v176 = vpop.f32.mrb[0].mxu0
  %v177 = vadd.f32 0.0, %v176
  %v178 = vpop.f32.mrb[0].mxu0
  %179 = vmatprep.mubr.f32.mxu0 0.0
  %180 = vmatmul.mubr.f32.gmra.mrb[0].mxu0 %v87
  %v181 = vpop.f32.mrb[0].mxu0
  %v182 = vadd.f32 0.0, %v181
  %v183 = vpop.f32.mrb[0].mxu0
  %184 = vmatprep.mubr.f32.mxu0 0.0
  %185 = vmatmul.mubr.f32.gmra.mrb[0].mxu0 %v88
  %v186 = vpop.f32.mrb[0].mxu0
  %v187 = vadd.f32 0.0, %v186
  %v188 = vpop.f32.mrb[0].mxu0
  %189 = vmatprep.mubr.f32.mxu0 0.0
  %190 = vmatmul.mubr.f32.gmra.mrb[0].mxu0 %v89
  %v191 = vpop.f32.mrb[0].mxu0
  %v192 = vadd.f32 0.0, %v191
  %v193 = vpop.f32.mrb[0].mxu0
  %194 = vmatprep.mubr.f32.mxu0 0.0
  %195 = vmatmul.mubr.f32.gmra.mrb[0].mxu0 %v90
  %v196 = vpop.f32.mrb[0].mxu0
  %v197 = vadd.f32 0.0, %v196
  %v198 = vpop.f32.mrb[0].mxu0
  %199 = vmatprep.mubr.f32.mxu0 0.0
  %200 = vmatmul.mubr.f32.gmra.mrb[0].mxu0 %v91
  %v201 = vpop.f32.mrb[0].mxu0
  %v202 = vadd.f32 0.0, %v201
  %v203 = vpop.f32.mrb[0].mxu0
  %204 = vmatprep.mubr.f32.mxu0 0.0
  %205 = vmatmul.mubr.f32.gmra.mrb[0].mxu0 %v92
  %v206 = vpop.f32.mrb[0].mxu0
  %v207 = vadd.f32 0.0, %v206
  %v208 = vpop.f32.mrb[0].mxu0
  %209 = vmatprep.mubr.f32.mxu0 0.0
  %210 = vmatmul.mubr.f32.gmra.mrb[0].mxu0 %v93
  %v211 = vpop.f32.mrb[0].mxu0
  %v212 = vadd.f32 0.0, %v211
  %v213 = vpop.f32.mrb[0].mxu0
  %214 = vmatprep.mubr.f32.mxu0 0.0
  %215 = vmatmul.mubr.f32.gmra.mrb[0].mxu0 %v94
  %v216 = vpop.f32.mrb[0].mxu0
  %v217 = vadd.f32 0.0, %v216
  %v218 = vpop.f32.mrb[0].mxu0
  %219 = vmatprep.mubr.f32.mxu0 0.0
  %220 = vmatmul.mubr.f32.gmra.mrb[0].mxu0 %v95
  %v221 = vpop.f32.mrb[0].mxu0
  %v222 = vadd.f32 0.0, %v221
  %v223 = vpop.f32.mrb[0].mxu0
  %224 = vmatprep.mubr.f32.mxu0 0.0
  %225 = vmatmul.mubr.f32.gmra.mrb[0].mxu0 %v96
  %v226 = vpop.f32.mrb[0].mxu0
  %v227 = vadd.f32 0.0, %v226
  %v228 = vpop.f32.mrb[0].mxu0
  %229 = vmatprep.mubr.f32.mxu0 0.0
  %230 = vmatmul.mubr.f32.gmra.mrb[0].mxu0 %v97
  %v231 = vpop.f32.mrb[0].mxu0
  %v232 = vadd.f32 0.0, %v231
  %v233 = vpop.f32.mrb[0].mxu0
  %234 = vmatprep.mubr.f32.mxu0 0.0
  %235 = vmatmul.mubr.f32.gmra.mrb[0].mxu0 %v98
  %v236 = vpop.f32.mrb[0].mxu0
  %v237 = vadd.f32 0.0, %v236
  %v238 = vpop.f32.mrb[0].mxu0
  %239 = vmatprep.mubr.f32.mxu0 0.0
  %240 = vmatmul.mubr.f32.gmra.mrb[0].mxu0 %v99
  %v241 = vpop.f32.mrb[0].mxu0
  %v242 = vadd.f32 0.0, %v241
  %v243 = vpop.f32.mrb[0].mxu0
  %244 = vdwg.mxu0
  %v245 = vadd.f32 %v52, %v167
  %v246 = vadd.f32 %v53, %v172
  %v247 = vadd.f32 %v54, %v177
  %v248 = vadd.f32 %v55, %v182
  %v249 = vadd.f32 %v56, %v187
  %v250 = vadd.f32 %v57, %v192
  %v251 = vadd.f32 %v58, %v197
  %v252 = vadd.f32 %v59, %v202
  %v253 = vadd.f32 %v60, %v207
  %v254 = vadd.f32 %v61, %v212
  %v255 = vadd.f32 %v62, %v217
  %v256 = vadd.f32 %v63, %v222
  %v257 = vadd.f32 %v64, %v227
  %v258 = vadd.f32 %v65, %v232
  %v259 = vadd.f32 %v66, %v237
  %v260 = vadd.f32 %v67, %v242
  %261 = vst [vmem:[#allocation2] sm:$0xff] %v245
  %262 = vst [vmem:[#allocation2 + $0x8] sm:$0xff] %v246
  %263 = vst [vmem:[#allocation2 + $0x10] sm:$0xff] %v247
  %264 = vst [vmem:[#allocation2 + $0x18] sm:$0xff] %v248
  %265 = vst [vmem:[#allocation2 + $0x20] sm:$0xff] %v249
  %266 = vst [vmem:[#allocation2 + $0x28] sm:$0xff] %v250
  %267 = vst [vmem:[#allocation2 + $0x30] sm:$0xff] %v251
  %268 = vst [vmem:[#allocation2 + $0x38] sm:$0xff] %v252
  %269 = vst [vmem:[#allocation2 + $0x40] sm:$0xff] %v253
  %270 = vst [vmem:[#allocation2 + $0x48] sm:$0xff] %v254
  %271 = vst [vmem:[#allocation2 + $0x50] sm:$0xff] %v255
  %272 = vst [vmem:[#allocation2 + $0x58] sm:$0xff] %v256
  %273 = vst [vmem:[#allocation2 + $0x60] sm:$0xff] %v257
  %274 = vst [vmem:[#allocation2 + $0x68] sm:$0xff] %v258
  %275 = vst [vmem:[#allocation2 + $0x70] sm:$0xff] %v259
  %276 = vst [vmem:[#allocation2 + $0x78] sm:$0xff] %v260
  // Predicated region
  $region18: #{sage_conv_forward.3} parent=0 // pred_check
    %p277 = pneg %p14
  $region19: #{sage_conv_forward.3} parent=0 // pred_check_branch
    %279 = sbr.rel (%p277) target = $region21
  $region20: #{sage_conv_forward.3} parent=0 // pred_region
    %v280 = vld [vmem:[#allocation2] sm:$0xff]
    %v281 = vld [vmem:[#allocation2 + $0x8] sm:$0xff]
    %v282 = vld [vmem:[#allocation2 + $0x10] sm:$0xff]
    %v283 = vld [vmem:[#allocation2 + $0x18] sm:$0xff]
    %v284 = vld [vmem:[#allocation2 + $0x20] sm:$0xff]
    %v285 = vld [vmem:[#allocation2 + $0x28] sm:$0xff]
    %v286 = vld [vmem:[#allocation2 + $0x30] sm:$0xff]
    %v287 = vld [vmem:[#allocation2 + $0x38] sm:$0xff]
    %v288 = vld [vmem:[#allocation2 + $0x40] sm:$0xff]
    %v289 = vld [vmem:[#allocation2 + $0x48] sm:$0xff]
    %v290 = vld [vmem:[#allocation2 + $0x50] sm:$0xff]
    %v291 = vld [vmem:[#allocation2 + $0x58] sm:$0xff]
    %v292 = vld [vmem:[#allocation2 + $0x60] sm:$0xff]
    %v293 = vld [vmem:[#allocation2 + $0x68] sm:$0xff]
    %v294 = vld [vmem:[#allocation2 + $0x70] sm:$0xff]
    %v295 = vld [vmem:[#allocation2 + $0x78] sm:$0xff]
    %v296 = vld [vmem:[%s2] sm:$0xff]
    %v297 = vld [vmem:[%s2 + $0x8] sm:$0xff]
    %v298 = vld [vmem:[%s2 + $0x10] sm:$0xff]
    %v299 = vld [vmem:[%s2 + $0x18] sm:$0xff]
    %v300 = vld [vmem:[%s2 + $0x20] sm:$0xff]
    %v301 = vld [vmem:[%s2 + $0x28] sm:$0xff]
    %v302 = vld [vmem:[%s2 + $0x30] sm:$0xff]
    %v303 = vld [vmem:[%s2 + $0x38] sm:$0xff]
    %v304 = vld [vmem:[%s2 + $0x40] sm:$0xff]
    %v305 = vld [vmem:[%s2 + $0x48] sm:$0xff]
    %v306 = vld [vmem:[%s2 + $0x50] sm:$0xff]
    %v307 = vld [vmem:[%s2 + $0x58] sm:$0xff]
    %v308 = vld [vmem:[%s2 + $0x60] sm:$0xff]
    %v309 = vld [vmem:[%s2 + $0x68] sm:$0xff]
    %v310 = vld [vmem:[%s2 + $0x70] sm:$0xff]
    %v311 = vld [vmem:[%s2 + $0x78] sm:$0xff]
    %313 = vset.pattern.permute.xlu0 0
    %314 = vperm.xlu0 %313, %v296
    %v315 = vpop.permute.xlu0 %314
    %318 = vset.pattern.permute.xlu0 0
    %319 = vperm.xlu0 %318, %v297
    %v320 = vpop.permute.xlu0 %319
    %323 = vset.pattern.permute.xlu0 0
    %324 = vperm.xlu0 %323, %v298
    %v325 = vpop.permute.xlu0 %324
    %328 = vset.pattern.permute.xlu0 0
    %329 = vperm.xlu0 %328, %v299
    %v330 = vpop.permute.xlu0 %329
    %333 = vset.pattern.permute.xlu0 0
    %334 = vperm.xlu0 %333, %v300
    %v335 = vpop.permute.xlu0 %334
    %338 = vset.pattern.permute.xlu0 0
    %339 = vperm.xlu0 %338, %v301
    %v340 = vpop.permute.xlu0 %339
    %343 = vset.pattern.permute.xlu0 0
    %344 = vperm.xlu0 %343, %v302
    %v345 = vpop.permute.xlu0 %344
    %348 = vset.pattern.permute.xlu0 0
    %349 = vperm.xlu0 %348, %v303
    %v350 = vpop.permute.xlu0 %349
    %353 = vset.pattern.permute.xlu0 0
    %354 = vperm.xlu0 %353, %v304
    %v355 = vpop.permute.xlu0 %354
    %358 = vset.pattern.permute.xlu0 0
    %359 = vperm.xlu0 %358, %v305
    %v360 = vpop.permute.xlu0 %359
    %363 = vset.pattern.permute.xlu0 0
    %364 = vperm.xlu0 %363, %v306
    %v365 = vpop.permute.xlu0 %364
    %368 = vset.pattern.permute.xlu0 0
    %369 = vperm.xlu0 %368, %v307
    %v370 = vpop.permute.xlu0 %369
    %373 = vset.pattern.permute.xlu0 0
    %374 = vperm.xlu0 %373, %v308
    %v375 = vpop.permute.xlu0 %374
    %378 = vset.pattern.permute.xlu0 0
    %379 = vperm.xlu0 %378, %v309
    %v380 = vpop.permute.xlu0 %379
    %383 = vset.pattern.permute.xlu0 0
    %384 = vperm.xlu0 %383, %v310
    %v385 = vpop.permute.xlu0 %384
    %388 = vset.pattern.permute.xlu0 0
    %389 = vperm.xlu0 %388, %v311
    %v390 = vpop.permute.xlu0 %389
    %v392 = vmul.f32 %v280, %v315
    %v393 = vmul.f32 %v281, %v320
    %v394 = vmul.f32 %v282, %v325
    %v395 = vmul.f32 %v283, %v330
    %v396 = vmul.f32 %v284, %v335
    %v397 = vmul.f32 %v285, %v340
    %v398 = vmul.f32 %v286, %v345
    %v399 = vmul.f32 %v287, %v350
    %v400 = vmul.f32 %v288, %v355
    %v401 = vmul.f32 %v289, %v360
    %v402 = vmul.f32 %v290, %v365
    %v403 = vmul.f32 %v291, %v370
    %v404 = vmul.f32 %v292, %v375
    %v405 = vmul.f32 %v293, %v380
    %v406 = vmul.f32 %v294, %v385
    %v407 = vmul.f32 %v295, %v390
    %408 = vst [vmem:[%s3] sm:$0xff] %v392
    %409 = vst [vmem:[%s3 + $0x8] sm:$0xff] %v393
    %410 = vst [vmem:[%s3 + $0x10] sm:$0xff] %v394
    %411 = vst [vmem:[%s3 + $0x18] sm:$0xff] %v395
    %412 = vst [vmem:[%s3 + $0x20] sm:$0xff] %v396
    %413 = vst [vmem:[%s3 + $0x28] sm:$0xff] %v397
    %414 = vst [vmem:[%s3 + $0x30] sm:$0xff] %v398
    %415 = vst [vmem:[%s3 + $0x38] sm:$0xff] %v399
    %416 = vst [vmem:[%s3 + $0x40] sm:$0xff] %v400
    %417 = vst [vmem:[%s3 + $0x48] sm:$0xff] %v401
    %418 = vst [vmem:[%s3 + $0x50] sm:$0xff] %v402
    %419 = vst [vmem:[%s3 + $0x58] sm:$0xff] %v403
    %420 = vst [vmem:[%s3 + $0x60] sm:$0xff] %v404
    %421 = vst [vmem:[%s3 + $0x68] sm:$0xff] %v405
    %422 = vst [vmem:[%s3 + $0x70] sm:$0xff] %v406
    %423 = vst [vmem:[%s3 + $0x78] sm:$0xff] %v407
  $region21: #{sage_conv_forward.3} parent=0 // pred_fallthru
    _
  // Predicated region
  $region22: #{sage_conv_forward.3} parent=0 // pred_check
    _
  $region23: #{sage_conv_forward.3} parent=0 // pred_check_branch
    %425 = sbr.rel (0) target = $region25
  $region24: #{sage_conv_forward.3} parent=0 // pred_region
    _
  $region25: #{sage_conv_forward.3} parent=0 // pred_fallthru
    _
  // Predicated region
  $region26: #{sage_conv_forward.3} parent=0 // pred_check
    _
  $region27: #{sage_conv_forward.3} parent=0 // pred_check_branch
    %427 = sbr.rel (0) target = $region29
  $region28: #{sage_conv_forward.3} parent=0 // pred_region
    _
  $region29: #{sage_conv_forward.3} parent=0 // pred_fallthru
    _

</llo_original>
